<compile_context>
chip_gen: v6e
topology: v6e:2x2x1
jax: 0.10.0
libtpu: 0.0.40
codegen_flags: <defaults>
</compile_context>

<pallas_src>
import functools

import jax
import jax.numpy as jnp
from jax import lax
from jax.experimental import pallas as pl
from jax.experimental.pallas import tpu as pltpu


_LANE = 128


def _round_up(a, m):
    return ((a + m - 1) // m) * m


# ----------------------------- kernels --------------------------------------


def _m_exp_eye_kernel(x_ref, o_ref, *, tr):
    """Path A: block (tb, tr, d) of the original (n, d, d) tensor, d % 128 == 0."""
    x = x_ref[...]
    row = lax.broadcasted_iota(jnp.int32, x.shape, 1) + pl.program_id(1) * tr
    col = lax.broadcasted_iota(jnp.int32, x.shape, 2)
    diag = row == col
    # Exact reference formulation: res = relu(x - 10*eye); out = exp(x - res) - 1 + eye
    eighty = jnp.where(diag, 10.0, 0.0).astype(x.dtype)
    x2 = x - jnp.maximum(x - eighty, 0.0)
    off = jnp.where(diag, 0.0, 1.0).astype(x.dtype)      # == one - eye
    o_ref[...] = (jnp.exp(x2) - off).astype(o_ref.dtype)


def _m_exp_flat_kernel(x_ref, o_ref, *, d, tr):
    """Path B: block (tr, 128) of the zero-padded (R, 128) flattened slab."""
    x = x_ref[...]
    dd = d * d
    # Grid-step base offset on the scalar unit; per-element math stays small.
    base_row_mod = (pl.program_id(0) * tr) % dd
    lrow = lax.broadcasted_iota(jnp.int32, x.shape, 0)
    col = lax.broadcasted_iota(jnp.int32, x.shape, 1)
    # flat index within one matrix; (dd + tr) * 128 must fit int32 (d <= 4095,
    # always true on this path since d % 128 != 0 shapes of interest are small).
    in_mat = ((lrow + base_row_mod) * _LANE + col) % dd
    diag = (in_mat % (d + 1)) == 0                        # i == j inside a matrix
    eighty = jnp.where(diag, 10.0, 0.0).astype(x.dtype)
    x2 = x - jnp.maximum(x - eighty, 0.0)
    off = jnp.where(diag, 0.0, 1.0).astype(x.dtype)
    o_ref[...] = (jnp.exp(x2) - off).astype(o_ref.dtype)


# ----------------------------- wrapper ---------------------------------------


def m_exp(x, *, max_block_bytes=4 << 20):
    n, d, d2 = x.shape
    assert d == d2, "M_Exp expects square (n, dim, dim) input"
    itemsize = jnp.dtype(x.dtype).itemsize
    total = n * d * d

    if d % _LANE == 0:
        # ---- Path A: lane-aligned last dim, diag = (row == col) ----
        row_bytes = d * itemsize
        max_rows = max(8, max_block_bytes // row_bytes)   # rows (tb*tr) per block
        if max_rows >= d:
            tb = max(1, min(n, max_rows // d))
            while n % tb:                                  # full, equal batch blocks
                tb -= 1
            tr = d
        else:
            tb = 1
            tr = (max_rows // 8) * 8
            while d % tr:                                  # tr divides d (d % 8 == 0)
                tr -= 8
        block_bytes = tb * tr * d * itemsize
        grid = (n // tb, d // tr)
        return pl.pallas_call(
            functools.partial(_m_exp_eye_kernel, tr=tr),
            out_shape=jax.ShapeDtypeStruct((n, d, d), x.dtype),
            grid=grid,
            in_specs=[pl.BlockSpec((tb, tr, d), lambda b, i: (b, i, 0))],
            out_specs=pl.BlockSpec((tb, tr, d), lambda b, i: (b, i, 0)),
            compiler_params=pltpu.CompilerParams(
                dimension_semantics=("parallel", "parallel"),
                vmem_limit_bytes=max(16 << 20, 4 * block_bytes + (2 << 20))),
        )(x)

    # ---- Path B: flatten + zero-pad to whole (tr, 128) blocks ----
    r_raw = pl.cdiv(total, _LANE)
    max_rows = max(8, (max_block_bytes // (_LANE * itemsize)) // 8 * 8)
    if r_raw <= max_rows:
        # Fits one block: no forced split (per-step overhead dominates otherwise).
        tr, steps = _round_up(r_raw, 8), 1
    else:
        steps = pl.cdiv(r_raw, max_rows)
        if steps % 2:
            steps += 1                                     # balanced split for 2-TC chips
        tr = _round_up(pl.cdiv(r_raw, steps), 8)
    r_pad = tr * steps
    block_bytes = tr * _LANE * itemsize

    flat = x.reshape(-1)
    pad = r_pad * _LANE - total
    if pad:
        flat = jnp.pad(flat, (0, pad))                     # pad values are benign (exp(0))
    slab = flat.reshape(r_pad, _LANE)

    out = pl.pallas_call(
        functools.partial(_m_exp_flat_kernel, d=d, tr=tr),
        out_shape=jax.ShapeDtypeStruct((r_pad, _LANE), x.dtype),
        grid=(steps,),
        in_specs=[pl.BlockSpec((tr, _LANE), lambda i: (i, 0))],
        out_specs=pl.BlockSpec((tr, _LANE), lambda i: (i, 0)),
        compiler_params=pltpu.CompilerParams(
            dimension_semantics=("parallel",),
            vmem_limit_bytes=max(16 << 20, 4 * block_bytes + (2 << 20))),
    )(slab)
    return out.reshape(-1)[:total].reshape(n, d, d)


def m_exp_ref(x):
    """Pure-JAX reference using the original PyTorch formulation."""
    n, d, _ = x.shape
    eye = jnp.eye(d, dtype=x.dtype)
    eighty = eye * 10.0
    res = jnp.maximum(x - eighty[None], 0.0)
    x2 = x - res
    return jnp.exp(x2) - 1.0 + eye[None]


if __name__ == "__main__":
    key = jax.random.PRNGKey(0)
    k1, k2, k3 = jax.random.split(key, 3)

    # Flat lane-dense path (d % 128 != 0, total a multiple of 128).
    x1 = jax.random.normal(k1, (2, 16, 16), dtype=jnp.float32) * 5.0
    o1 = m_exp(x1)
    jax.block_until_ready(o1)
    assert o1.shape == x1.shape
    assert jnp.allclose(o1, m_exp_ref(x1), atol=1e-5, rtol=1e-5), "mismatch (flat path)"

    # Flat path with zero padding (total not a multiple of 128).
    x2 = jax.random.normal(k2, (3, 12, 12), dtype=jnp.float32) * 5.0
    o2 = m_exp(x2)
    jax.block_until_ready(o2)
    assert jnp.allclose(o2, m_exp_ref(x2), atol=1e-5, rtol=1e-5), "mismatch (padded flat path)"

    # Lane-aligned path (d % 128 == 0, diag via row == col, no modulo).
    x3 = jax.random.normal(k3, (2, 128, 128), dtype=jnp.float32) * 5.0
    o3 = m_exp(x3)
    jax.block_until_ready(o3)
    assert jnp.allclose(o3, m_exp_ref(x3), atol=1e-5, rtol=1e-5), "mismatch (eye path)"

    print("KERNEL_OK")
</pallas_src>

<mosaic_0001>
module attributes {stable_mosaic.version = 11 : i64} {
  func.func @_m_exp_flat_kernel(%arg0: i32, %arg1: memref<8x128xf32, #tpu.memory_space<vmem>>, %arg2: memref<8x128xf32, #tpu.memory_space<vmem>>) attributes {dimension_semantics = [#tpu.dimension_semantics<parallel>], iteration_bounds = array<i64: 1>, scalar_prefetch = 0 : i64, scratch_operands = 0 : i64, tpu.core_type = #tpu.core_type<tc>, window_params = [{transform_indices = @transform_0, window_bounds = array<i64: 8, 128>}, {transform_indices = @transform_1, window_bounds = array<i64: 8, 128>}]} {
    %c0 = arith.constant 0 : index
    %c0_0 = arith.constant 0 : index
    %0 = vector.load %arg1[%c0, %c0_0] : memref<8x128xf32, #tpu.memory_space<vmem>>, vector<8x128xf32>
    %c8_i32 = arith.constant 8 : i32
    %1 = arith.muli %arg0, %c8_i32 : i32
    %c256_i32 = arith.constant 256 : i32
    %c0_i32 = arith.constant 0 : i32
    %2 = arith.cmpi eq, %c256_i32, %c0_i32 : i32
    %c1_i32 = arith.constant 1 : i32
    %3 = arith.select %2, %c1_i32, %c256_i32 : i32
    %4 = arith.remsi %1, %3 : i32
    %c0_i32_1 = arith.constant 0 : i32
    %5 = arith.cmpi ne, %4, %c0_i32_1 : i32
    %c0_i32_2 = arith.constant 0 : i32
    %6 = arith.cmpi slt, %4, %c0_i32_2 : i32
    %c0_i32_3 = arith.constant 0 : i32
    %7 = arith.cmpi slt, %3, %c0_i32_3 : i32
    %8 = arith.xori %6, %7 : i1
    %9 = arith.andi %8, %5 : i1
    %10 = arith.addi %4, %3 : i32
    %11 = arith.select %9, %10, %4 : i32
    %12 = tpu.iota {dimensions = array<i32: 0>} : vector<8x128xi32>
    %13 = tpu.iota {dimensions = array<i32: 1>} : vector<8x128xi32>
    %14 = vector.broadcast %11 : i32 to vector<8x128xi32>
    %15 = arith.addi %12, %14 : vector<8x128xi32>
    %c128_i32 = arith.constant 128 : i32
    %16 = vector.broadcast %c128_i32 : i32 to vector<8x128xi32>
    %17 = arith.muli %15, %16 : vector<8x128xi32>
    %18 = arith.addi %17, %13 : vector<8x128xi32>
    %c256_i32_4 = arith.constant 256 : i32
    %c0_i32_5 = arith.constant 0 : i32
    %19 = arith.cmpi eq, %c256_i32_4, %c0_i32_5 : i32
    %c1_i32_6 = arith.constant 1 : i32
    %20 = arith.select %19, %c1_i32_6, %c256_i32_4 : i32
    %21 = vector.broadcast %20 : i32 to vector<8x128xi32>
    %22 = arith.remsi %18, %21 : vector<8x128xi32>
    %c0_i32_7 = arith.constant 0 : i32
    %23 = vector.broadcast %c0_i32_7 : i32 to vector<8x128xi32>
    %24 = arith.cmpi ne, %22, %23 : vector<8x128xi32>
    %c0_i32_8 = arith.constant 0 : i32
    %25 = vector.broadcast %c0_i32_8 : i32 to vector<8x128xi32>
    %26 = arith.cmpi slt, %22, %25 : vector<8x128xi32>
    %c0_i32_9 = arith.constant 0 : i32
    %27 = arith.cmpi slt, %20, %c0_i32_9 : i32
    %28 = vector.broadcast %27 : i1 to vector<8x128xi1>
    %29 = vector.broadcast %28 : vector<8x128xi1> to vector<8x128xi1>
    %30 = arith.xori %26, %29 : vector<8x128xi1>
    %31 = arith.andi %30, %24 : vector<8x128xi1>
    %32 = vector.broadcast %20 : i32 to vector<8x128xi32>
    %33 = arith.addi %22, %32 : vector<8x128xi32>
    %34 = arith.select %31, %33, %22 : vector<8x128xi1>, vector<8x128xi32>
    %c17_i32 = arith.constant 17 : i32
    %c0_i32_10 = arith.constant 0 : i32
    %35 = arith.cmpi eq, %c17_i32, %c0_i32_10 : i32
    %c1_i32_11 = arith.constant 1 : i32
    %36 = arith.select %35, %c1_i32_11, %c17_i32 : i32
    %37 = vector.broadcast %36 : i32 to vector<8x128xi32>
    %38 = arith.remsi %34, %37 : vector<8x128xi32>
    %c0_i32_12 = arith.constant 0 : i32
    %39 = vector.broadcast %c0_i32_12 : i32 to vector<8x128xi32>
    %40 = arith.cmpi ne, %38, %39 : vector<8x128xi32>
    %c0_i32_13 = arith.constant 0 : i32
    %41 = vector.broadcast %c0_i32_13 : i32 to vector<8x128xi32>
    %42 = arith.cmpi slt, %38, %41 : vector<8x128xi32>
    %c0_i32_14 = arith.constant 0 : i32
    %43 = arith.cmpi slt, %36, %c0_i32_14 : i32
    %44 = vector.broadcast %43 : i1 to vector<8x128xi1>
    %45 = vector.broadcast %44 : vector<8x128xi1> to vector<8x128xi1>
    %46 = arith.xori %42, %45 : vector<8x128xi1>
    %47 = arith.andi %46, %40 : vector<8x128xi1>
    %48 = vector.broadcast %36 : i32 to vector<8x128xi32>
    %49 = arith.addi %38, %48 : vector<8x128xi32>
    %50 = arith.select %47, %49, %38 : vector<8x128xi1>, vector<8x128xi32>
    %c0_i32_15 = arith.constant 0 : i32
    %51 = vector.broadcast %c0_i32_15 : i32 to vector<8x128xi32>
    %52 = arith.cmpi eq, %50, %51 : vector<8x128xi32>
    %cst = arith.constant 1.000000e+01 : f32
    %cst_16 = arith.constant 0.000000e+00 : f32
    %53 = vector.broadcast %cst : f32 to vector<8x128xf32>
    %54 = vector.broadcast %cst_16 : f32 to vector<8x128xf32>
    %55 = arith.select %52, %53, %54 : vector<8x128xi1>, vector<8x128xf32>
    %56 = arith.subf %0, %55 : vector<8x128xf32>
    %cst_17 = arith.constant 0.000000e+00 : f32
    %57 = vector.broadcast %cst_17 : f32 to vector<8x128xf32>
    %58 = arith.maximumf %56, %57 : vector<8x128xf32>
    %59 = arith.subf %0, %58 : vector<8x128xf32>
    %cst_18 = arith.constant 0.000000e+00 : f32
    %cst_19 = arith.constant 1.000000e+00 : f32
    %60 = vector.broadcast %cst_18 : f32 to vector<8x128xf32>
    %61 = vector.broadcast %cst_19 : f32 to vector<8x128xf32>
    %62 = arith.select %52, %60, %61 : vector<8x128xi1>, vector<8x128xf32>
    %63 = math.exp %59 : vector<8x128xf32>
    %64 = arith.subf %63, %62 : vector<8x128xf32>
    %c0_20 = arith.constant 0 : index
    %c0_21 = arith.constant 0 : index
    %65 = vector.load %arg2[%c0_20, %c0_21] : memref<8x128xf32, #tpu.memory_space<vmem>>, vector<8x128xf32>
    tpu.vector_store %arg2[%c0_20, %c0_21], %64 {strides = array<i32>} : memref<8x128xf32, #tpu.memory_space<vmem>>, vector<8x128xf32>,
    return
  }
  func.func @transform_0(%arg0: i32) -> (i32, i32) {
    %c0_i32 = arith.constant 0 : i32
    %c0_i32_0 = arith.constant 0 : i32
    return %arg0, %c0_i32 : i32, i32
  }
  func.func @transform_1(%arg0: i32) -> (i32, i32) {
    %c0_i32 = arith.constant 0 : i32
    %c0_i32_0 = arith.constant 0 : i32
    return %arg0, %c0_i32 : i32, i32
  }
}

</mosaic_0001>

<llo_original>
// kernel: tpu_custom_call.1
$region0: #{tpu_custom_call.1}
  #allocation0 [shape = 'u32[]', space=smem, size = 0x4, offset = 0x4, fixed_abs, tag = 'smem constant byte address 0x4 - core index']
  #allocation1 [shape = 'u32[144,128]{1,0:T(1,128)}', space=vmem, size = 0x12000, scoped, tag = 'internal scratch']
  %s0 = inlined_call_operand.hbm [shape: f32[8,128], index: 0, kind: input, shape index: {}]
  %s1 = inlined_call_operand.hbm [shape: f32[8,128], index: 1, kind: output, shape index: {}]
  %s2 = sld [smem:[#allocation0]]
  $region18: #{tpu_custom_call.1} parent=0
    _
  %s4 = ssub.s32 1, %s2
  %s5 = scalar_select 0, %s4, %s2
  $region1: #{tpu_custom_call.1} parent=0
    #allocation2 [shape = 'u8[4096]{0}', space=vmem, size = 0x1000, scoped, tag = 'input window, operand 0, single buffered']
    #allocation3 [shape = 's32[1]{0}', space=sflag, size = 0x4, scoped, tag = 'scoped memory for tpu_custom_call.1']
    #allocation4 [shape = 's32[1]{0}', space=sflag, size = 0x4, scoped, tag = 'scoped memory for tpu_custom_call.1']
    #allocation5 [shape = 'u8[4096]{0}', space=vmem, size = 0x1000, scoped, tag = 'output window, operand 0, single buffered']
    %6 = vsyncpa [#allocation3], 0
    %7 = vsyncpa [#allocation4], 0
    // Predicated region
    $region2: #{tpu_custom_call.1} parent=1 // pred_check
      _
    $region3: #{tpu_custom_call.1} parent=1 // pred_check_branch
      %9 = sbr.rel (0) target = $region5
    $region4: #{tpu_custom_call.1} parent=1 // pred_region
      %s11 = ssub.s32 128, 128
      %12 = vsyncadd [#allocation3], %s11
      %s14 = sshll.u32 [#allocation2], 4
      %s15 = int_to_ptr.vmem [resolvable:$true] %s14
      %17 = dma.hbm_to_vmem [thread:$0]  %s0, 128, %s15, [#allocation3]
    $region5: #{tpu_custom_call.1} parent=1 // pred_fallthru
      _
    // Predicated region
    $region6: #{tpu_custom_call.1} parent=1 // pred_check
      _
    $region7: #{tpu_custom_call.1} parent=1 // pred_check_branch
      %19 = sbr.rel (0) target = $region9
    $region8: #{tpu_custom_call.1} parent=1 // pred_region
      %20 = dma.done [#allocation3], 128
    $region9: #{tpu_custom_call.1} parent=1 // pred_fallthru
      _
    %v21 = vld [vmem:[#allocation2] sm:$0xff]
    %s22 = smul.u32 0, 8
    %p23 = scmp.lt.s32.totalorder %s22, 0
    %s24 = ssub.s32 0, %s22
    %s25 = scalar_select %p23, %s24, %s22
    %s26 = sand.u32 %s25, 255
    %s27 = ssub.s32 0, %s26
    %s28 = scalar_select %p23, %s27, %s26
    %p29 = scmp.ne.s32.totalorder %s28, 0
    %p30 = scmp.lt.s32.totalorder %s28, 0
    %p31 = pnand %p30, %p29
    %p32 = pneg %p31
    %s33 = sadd.s32 %s28, 256
    %s34 = scalar_select %p32, %s33, %s28
    %v35 = vlaneseq
    %v36 = vshrl.u32 %v35, 7
    %v37 = vlaneseq
    %v38 = vand.u32 %v37, 127
    %v39 = vstv %s34
    %v40 = vadd.s32 %v36, %v39
    %v41 = vmul.u32 %v40, 128
    %v42 = vadd.s32 %v41, %v38
    %vm43 = vcmp.lt.s32.totalorder %v42, 0
    %v44 = vsub.s32 0, %v42
    %v45 = vsel %vm43, %v44, %v42
    %v46 = vshrl.u32 %v45, 8
    %v47 = vand.u32 %v45, 255
    %v48 = vsub.s32 0, %v47
    %v49 = vsel %vm43, %v48, %v47
    %vm50 = vcmp.ne.s32.totalorder %v49, 0
    %vm51 = vcmp.lt.s32.totalorder %v49, 0
    %vm52 = vmand %vm51, %vm50
    %v53 = vadd.s32 %v49, 256
    %v54 = vsel %vm52, %v53, %v49
    %vm55 = vcmp.lt.s32.totalorder %v54, 0
    %v56 = vsub.s32 0, %v54
    %v57 = vsel %vm55, %v56, %v54
    %v58 = vmul.u32.u64.compose %v57, 4042322161
    %v59 = vextract.low.u32 %v58
    %v60 = vextract.high.u32 %v58
    %v61 = vshrl.u32 %v60, 4
    %v62 = vmul.u32 %v61, 17
    %v63 = vsub.s32 %v57, %v62
    %v64 = vsub.s32 0, %v63
    %v65 = vsel %vm55, %v64, %v63
    %vm66 = vcmp.ne.s32.totalorder %v65, 0
    %vm67 = vcmp.lt.s32.totalorder %v65, 0
    %vm68 = vmand %vm67, %vm66
    %v69 = vadd.s32 %v65, 17
    %v70 = vsel %vm68, %v69, %v65
    %vm71 = vcmp.eq.s32.totalorder %v70, 0
    %v72 = vsel %vm71, 10.0, 0.0
    %v73 = vsub.f32 %v21, %v72
    %v74 = vmax.f32 %v73, 0.0
    %v75 = vsub.f32 %v21, %v74
    %v76 = vsel %vm71, 0.0, 1.0
    %v77 = vmul.f32 %v75, 1.442695
    %v78 = vpow.pop %v77
    %v79 = vsub.f32 %v78, %v76
    %80 = vst [vmem:[#allocation5] sm:$0xff] %v79
    // Predicated region
    $region10: #{tpu_custom_call.1} parent=1 // pred_check
      _
    $region11: #{tpu_custom_call.1} parent=1 // pred_check_branch
      %82 = sbr.rel (0) target = $region13
    $region12: #{tpu_custom_call.1} parent=1 // pred_region
      %s84 = ssub.s32 128, 128
      %85 = vsyncadd [#allocation4], %s84
      %s87 = sshll.u32 [#allocation5], 4
      %s88 = int_to_ptr.vmem [resolvable:$true] %s87
      %90 = dma.vmem_to_hbm [thread:$0]  %s88, 128, %s1, [#allocation4]
    $region13: #{tpu_custom_call.1} parent=1 // pred_fallthru
      _
    // Predicated region
    $region14: #{tpu_custom_call.1} parent=1 // pred_check
      _
    $region15: #{tpu_custom_call.1} parent=1 // pred_check_branch
      %92 = sbr.rel (0) target = $region17
    $region16: #{tpu_custom_call.1} parent=1 // pred_region
      %93 = dma.done [#allocation4], 128
    $region17: #{tpu_custom_call.1} parent=1 // pred_fallthru
      _
    %94 = vsyncpa [#allocation3], 1
    %95 = vsyncpa [#allocation4], 1

</llo_original>
